<compile_context>
chip_gen: v5e
topology: v5e:2x2
jax: 0.10.0
libtpu: 0.0.40
codegen_flags: <defaults>
</compile_context>

<pallas_src>
import jax
import jax.numpy as jnp
from jax.experimental import pallas as pl
from jax.experimental.pallas import tpu as pltpu

_LANES = 128
_MAX_TILE_ROWS = 2048        # (2048, 128) f32 block = 1 MiB per buffer
_MIN_PALLAS_BATCH = 8192     # below this, a fused XLA expression wins outright


def _round_up(x, m):
    return ((x + m - 1) // m) * m


def _model_kernel(x_ref, p_ref, o_ref):
    # p_ref: (2,) f32 in SMEM -> [w, b]
    w = p_ref[0]
    b = p_ref[1]
    z = x_ref[...] * w + b                    # linear(1->1): VPU mul-add
    # sigmoid(z) == 0.5 * tanh(0.5 * z) + 0.5 -> exactly one EUP op/element.
    h = 0.5 * jnp.tanh(0.5 * z) + 0.5
    o_ref[...] = h * w + b                    # linear(1->1) again (as in the module)


def myawesome_model_forward(x, weight, bias):
    """x: (B, 1) float32, weight: (1, 1), bias: (1,) -> (B, 1)."""
    B, F = x.shape
    assert F == 1, "forward only well-defined for n_input_features == 1"

    w = weight.reshape(()).astype(x.dtype)
    b = bias.reshape(()).astype(x.dtype)

    # Tiny-batch fast path: the whole problem is a handful of vregs; launching
    # a Pallas kernel (plus repack HLOs) costs more than the compute itself.
    if B < _MIN_PALLAS_BATCH:
        h = 0.5 * jnp.tanh(0.5 * (x * w + b)) + 0.5
        return h * w + b

    # Pack the two scalar parameters into one 1-D SMEM array.
    params = jnp.stack([w, b])

    # ---- lane-dense repack: (B, 1) -> (rows, 128) ----
    # Only pad to the 128-lane granularity (one copy, skipped when aligned);
    # rows need NOT be a multiple of 8: either the single block covers the
    # full row dim, or the multi-block path uses a cdiv grid whose partial
    # last block Pallas handles with padded reads / masked writes.
    x_flat = x.reshape(B)
    B_pad = _round_up(B, _LANES)
    if B_pad != B:
        x_flat = jnp.pad(x_flat, (0, B_pad - B))
    rows = B_pad // _LANES
    x2d = x_flat.reshape(rows, _LANES)

    if rows <= 8:
        # Whole slab is one (<=8, 128) block; block == full array dims is legal.
        tile_rows = rows
    else:
        # Large, lane-dense blocks, but always >= 2 grid steps so the
        # "parallel" axis can be split across v7x's two TensorCores.
        tile_rows = min(_MAX_TILE_ROWS, _round_up(pl.cdiv(rows, 2), 8))
    grid = (pl.cdiv(rows, tile_rows),)

    out2d = pl.pallas_call(
        _model_kernel,
        out_shape=jax.ShapeDtypeStruct((rows, _LANES), x.dtype),
        grid_spec=pltpu.PrefetchScalarGridSpec(
            num_scalar_prefetch=0,
            grid=grid,
            in_specs=[
                pl.BlockSpec((tile_rows, _LANES), lambda i: (i, 0)),
                pl.BlockSpec(memory_space=pltpu.MemorySpace.SMEM),
            ],
            out_specs=pl.BlockSpec((tile_rows, _LANES), lambda i: (i, 0)),
        ),
        compiler_params=pltpu.CompilerParams(
            # "parallel" lets the 2 TCs on v7x split the grid; no-op on v5e/v6e.
            dimension_semantics=("parallel",),
            # Tiles are at most ~4 MiB total with double buffering.
            vmem_limit_bytes=32 * 1024 * 1024,
        ),
    )(x2d, params)

    # Restore the (B, 1) column layout; skip the slice pass when already aligned.
    if B_pad == B:
        return out2d.reshape(B, 1)
    return out2d.reshape(B_pad, 1)[:B]


if __name__ == "__main__":
    key = jax.random.PRNGKey(0)
    kx, kw, kb = jax.random.split(key, 3)

    n_input_features = 1          # see layout note at top of file

    # Deterministic parameter init (mimics nn.Linear uniform(-1/sqrt(fan_in), ..)).
    bound = 1.0 / jnp.sqrt(jnp.float32(n_input_features))
    weight = jax.random.uniform(kw, (1, n_input_features), jnp.float32, -bound, bound)
    bias = jax.random.uniform(kb, (1,), jnp.float32, -bound, bound)

    def reference(x):
        return jax.nn.sigmoid(x @ weight.T + bias) @ weight.T + bias

    # Three paths: tiny-batch jnp fallback, unaligned Pallas (pad + partial
    # tail block + 2 grid steps), aligned Pallas (no pad, no slice).
    for batch in (256, 9000, 16384):
        x = jax.random.normal(jax.random.fold_in(kx, batch),
                              (batch, n_input_features), jnp.float32)
        out = myawesome_model_forward(x, weight, bias)
        out = jax.block_until_ready(out)
        ref = reference(x)
        assert out.shape == (batch, 1)
        assert jnp.allclose(out, ref, atol=1e-5, rtol=1e-5), (
            f"mismatch at batch={batch}: max err "
            f"{jnp.max(jnp.abs(out - ref))}")

    print("KERNEL_OK")
</pallas_src>

<mosaic_0001>
module attributes {stable_mosaic.version = 11 : i64} {
  func.func @_model_kernel(%arg0: i32, %arg1: memref<40x128xf32, #tpu.memory_space<vmem>>, %arg2: memref<2xf32, #tpu.memory_space<smem>>, %arg3: memref<40x128xf32, #tpu.memory_space<vmem>>) attributes {dimension_semantics = [#tpu.dimension_semantics<parallel>], iteration_bounds = array<i64: 2>, scalar_prefetch = 0 : i64, scratch_operands = 0 : i64, tpu.core_type = #tpu.core_type<tc>, window_params = [{transform_indices = @transform_0, window_bounds = array<i64: 40, 128>}, {transform_indices = @transform_1, window_bounds = array<i64: 2>}, {transform_indices = @transform_2, window_bounds = array<i64: 40, 128>}]} {
    %c0 = arith.constant 0 : index
    %0 = memref.load %arg2[%c0] : memref<2xf32, #tpu.memory_space<smem>>
    %c1 = arith.constant 1 : index
    %1 = memref.load %arg2[%c1] : memref<2xf32, #tpu.memory_space<smem>>
    %c0_0 = arith.constant 0 : index
    %c0_1 = arith.constant 0 : index
    %2 = vector.load %arg1[%c0_0, %c0_1] : memref<40x128xf32, #tpu.memory_space<vmem>>, vector<40x128xf32>
    %3 = vector.broadcast %0 : f32 to vector<40x128xf32>
    %4 = arith.mulf %2, %3 : vector<40x128xf32>
    %5 = vector.broadcast %1 : f32 to vector<40x128xf32>
    %6 = arith.addf %4, %5 : vector<40x128xf32>
    %cst = arith.constant 5.000000e-01 : f32
    %7 = vector.broadcast %cst : f32 to vector<40x128xf32>
    %8 = arith.mulf %7, %6 : vector<40x128xf32>
    %9 = math.tanh %8 : vector<40x128xf32>
    %cst_2 = arith.constant 5.000000e-01 : f32
    %10 = vector.broadcast %cst_2 : f32 to vector<40x128xf32>
    %11 = arith.mulf %10, %9 : vector<40x128xf32>
    %cst_3 = arith.constant 5.000000e-01 : f32
    %12 = vector.broadcast %cst_3 : f32 to vector<40x128xf32>
    %13 = arith.addf %11, %12 : vector<40x128xf32>
    %14 = vector.broadcast %0 : f32 to vector<40x128xf32>
    %15 = arith.mulf %13, %14 : vector<40x128xf32>
    %16 = vector.broadcast %1 : f32 to vector<40x128xf32>
    %17 = arith.addf %15, %16 : vector<40x128xf32>
    %c0_4 = arith.constant 0 : index
    %c0_5 = arith.constant 0 : index
    %18 = vector.load %arg3[%c0_4, %c0_5] : memref<40x128xf32, #tpu.memory_space<vmem>>, vector<40x128xf32>
    tpu.vector_store %arg3[%c0_4, %c0_5], %17 {strides = array<i32>} : memref<40x128xf32, #tpu.memory_space<vmem>>, vector<40x128xf32>,
    return
  }
  func.func @transform_0(%arg0: i32) -> (i32, i32) {
    %c0_i32 = arith.constant 0 : i32
    %c0_i32_0 = arith.constant 0 : i32
    return %arg0, %c0_i32 : i32, i32
  }
  func.func @transform_1(%arg0: i32) -> i32 {
    %c0_i32 = arith.constant 0 : i32
    %c0_i32_0 = arith.constant 0 : i32
    return %c0_i32 : i32
  }
  func.func @transform_2(%arg0: i32) -> (i32, i32) {
    %c0_i32 = arith.constant 0 : i32
    %c0_i32_0 = arith.constant 0 : i32
    return %arg0, %c0_i32 : i32, i32
  }
}

</mosaic_0001>

<llo_original>
// kernel: tpu_custom_call.1
$region0: #{tpu_custom_call.1}
  #allocation0 [shape = 'u32[]', space=smem, size = 0x4, offset = 0x4, fixed_abs, tag = 'smem constant byte address 0x4 - core index']
  #allocation1 [shape = 'u32[72,128]{1,0:T(1,128)}', space=vmem, size = 0x9000, scoped, tag = 'internal scratch']
  %s0 = inlined_call_operand.hbm [shape: f32[71,128], index: 0, kind: input, shape index: {}]
  %s1 = inlined_call_operand.hbm [shape: f32[2], index: 1, kind: input, shape index: {}]
  %s2 = inlined_call_operand.hbm [shape: f32[71,128], index: 2, kind: output, shape index: {}]
  %s3 = sld [smem:[#allocation0]]
  $region49: #{tpu_custom_call.1} parent=0
    _
  %s5 = ssub.s32 1, %s3
  %s6 = scalar_select 0, %s5, %s3
  $region1: #{tpu_custom_call.1} parent=0
    #allocation2 [shape = 'u8[40960]{0}', space=vmem, size = 0xa000, scoped, tag = 'input window, operand 0']
    #allocation3 [shape = 's32[2]{0}', space=sflag, size = 0x8, scoped, tag = 'scoped memory for tpu_custom_call.1']
    #allocation4 [shape = 's32[2]{0}', space=sflag, size = 0x8, scoped, tag = 'scoped memory for tpu_custom_call.1']
    #allocation5 [shape = 's32[2]{0}', space=sflag, size = 0x8, scoped, tag = 'scoped memory for tpu_custom_call.1']
    #allocation6 [shape = 'u8[512]{0}', space=smem, size = 0x200, scoped, tag = 'input window, operand 1, single buffered']
    #allocation7 [shape = 'u8[40960]{0}', space=vmem, size = 0xa000, scoped, tag = 'output window, operand 0']
    %7 = vsyncpa [#allocation3], 0
    %s8 = scalar_lea.sflag [#allocation3], 1
    %9 = vsyncpa %s8, 0
    %10 = vsyncpa [#allocation5], 0
    %11 = vsyncpa [#allocation4], 0
    %s12 = scalar_lea.sflag [#allocation4], 1
    %13 = vsyncpa %s12, 0
    loop: start=0, step=1, limit=4
    $region2: #{tpu_custom_call.1} parent=1 // loop_pre_header
      _
    $region3: #{tpu_custom_call.1} parent=1 // loop_header
      %s15 = sphi 0, %s19
      %p16 = scmp.ge.s32.totalorder %s15, 4
      %s25 = sphi 0, %s27
      %s28 = sphi 0, %s25
      %s29 = sphi 0, %s28
      %s45 = sphi 0, %s29
      %s49 = sphi 0, %s49
      %s51 = sphi 0, %s49
      %s52 = sphi 0, %s51
      %s66 = sphi 0, %s52
      %s72 = sphi 0, %s74
      %s75 = sphi 0, %s72
      %s76 = sphi 0, %s75
      %s92 = sphi 0, %s76
    $region4: #{tpu_custom_call.1} parent=1 // loop_header_branch
      %18 = sbr.rel (%p16) target = $region8
    $region5: #{tpu_custom_call.1} parent=1 // loop_body
      %s20 = ssub.s32 %s15, 1
      %s21 = ssub.s32 %s15, 2
      %s22 = sadd.s32 %s15, 1
      %s23 = ssub.s32 %s15, %s22
      %p24 = scmp.eq.s32.totalorder %s23, 0
      %s26 = sadd.s32 %s25, 1
      %s27 = scalar_select %p24, %s25, %s26
      %p30 = pneg %p24
      %p31 = scmp.eq.s32.totalorder %s15, 1
      %p32 = por %p30, %p31
      %p33 = scmp.ne.s32.totalorder %s25, %s28
      %p34 = scmp.eq.s32.totalorder %s15, 0
      %p35 = por %p33, %p34
      %p36 = scmp.ne.s32.totalorder %s25, %s28
      %p37 = scmp.eq.s32.totalorder %s20, 1
      %p38 = por %p36, %p37
      %p39 = scmp.ne.s32.totalorder %s28, %s29
      %p40 = scmp.eq.s32.totalorder %s20, 0
      %p41 = por %p39, %p40
      %p42 = scmp.ne.s32.totalorder %s28, %s29
      %p43 = scmp.eq.s32.totalorder %s21, 1
      %p44 = por %p42, %p43
      %p46 = scmp.ne.s32.totalorder %s29, %s45
      %p47 = scmp.eq.s32.totalorder %s21, 0
      %p48 = por %p46, %p47
      %s50 = sadd.s32 %s49, 1
      %p53 = scmp.eq.s32.totalorder %s15, 1
      %p54 = scmp.ne.s32.totalorder %s49, %s51
      %p55 = scmp.eq.s32.totalorder %s15, 0
      %p56 = por %p54, %p55
      %p57 = scmp.ne.s32.totalorder %s49, %s51
      %p58 = scmp.eq.s32.totalorder %s20, 1
      %p59 = por %p57, %p58
      %p60 = scmp.ne.s32.totalorder %s51, %s52
      %p61 = scmp.eq.s32.totalorder %s20, 0
      %p62 = por %p60, %p61
      %p63 = scmp.ne.s32.totalorder %s51, %s52
      %p64 = scmp.eq.s32.totalorder %s21, 1
      %p65 = por %p63, %p64
      %p67 = scmp.ne.s32.totalorder %s52, %s66
      %p68 = scmp.eq.s32.totalorder %s21, 0
      %p69 = por %p67, %p68
      %s70 = ssub.s32 %s15, %s22
      %p71 = scmp.eq.s32.totalorder %s70, 0
      %s73 = sadd.s32 %s72, 1
      %s74 = scalar_select %p71, %s72, %s73
      %p77 = pneg %p71
      %p78 = scmp.eq.s32.totalorder %s15, 1
      %p79 = por %p77, %p78
      %p80 = scmp.ne.s32.totalorder %s72, %s75
      %p81 = scmp.eq.s32.totalorder %s15, 0
      %p82 = por %p80, %p81
      %p83 = scmp.ne.s32.totalorder %s72, %s75
      %p84 = scmp.eq.s32.totalorder %s20, 1
      %p85 = por %p83, %p84
      %p86 = scmp.ne.s32.totalorder %s75, %s76
      %p87 = scmp.eq.s32.totalorder %s20, 0
      %p88 = por %p86, %p87
      %p89 = scmp.ne.s32.totalorder %s75, %s76
      %p90 = scmp.eq.s32.totalorder %s21, 1
      %p91 = por %p89, %p90
      %p93 = scmp.ne.s32.totalorder %s76, %s92
      %p94 = scmp.eq.s32.totalorder %s21, 0
      %p95 = por %p93, %p94
      %p96 = scmp.le.s32.totalorder 1, %s15
      %p97 = scmp.lt.s32.totalorder %s15, 3
      %p98 = pnand %p96, %p97
      %p99 = pneg %p98
      // Predicated region
      $region9: #{tpu_custom_call.1} parent=5 // pred_check
        _
      $region10: #{tpu_custom_call.1} parent=5 // pred_check_branch
        %101 = sbr.rel (%p98) target = $region12
      $region11: #{tpu_custom_call.1} parent=5 // pred_region
        %s102 = ssub.s32 %s15, 1
        // Predicated region
        $region13: #{tpu_custom_call.1} parent=11 // pred_check
          %p103 = pneg %p62
        $region14: #{tpu_custom_call.1} parent=11 // pred_check_branch
          %105 = sbr.rel (%p103) target = $region16
        $region15: #{tpu_custom_call.1} parent=11 // pred_region
          %107 = vsyncadd [#allocation5], 0
          %s109 = sshll.u32 %s1, 4
          %s110 = int_to_ptr.hbm [resolvable:$true] %s109
          %112 = dma.hbm_to_smem %s110, 16, [#allocation6], [#allocation5]
        $region16: #{tpu_custom_call.1} parent=11 // pred_fallthru
          _
      $region12: #{tpu_custom_call.1} parent=5 // pred_fallthru
        _
      %p113 = scmp.lt.s32.totalorder %s15, 2
      // Predicated region
      $region17: #{tpu_custom_call.1} parent=5 // pred_check
        %p114 = pneg %p113
      $region18: #{tpu_custom_call.1} parent=5 // pred_check_branch
        %116 = sbr.rel (%p114) target = $region20
      $region19: #{tpu_custom_call.1} parent=5 // pred_region
        // Predicated region
        $region21: #{tpu_custom_call.1} parent=19 // pred_check
          %p117 = pneg %p35
        $region22: #{tpu_custom_call.1} parent=19 // pred_check_branch
          %119 = sbr.rel (%p117) target = $region24
        $region23: #{tpu_custom_call.1} parent=19 // pred_region
          %s120 = sand.u32 %s25, 1
          %s121 = scalar_lea.sflag [#allocation3], %s120
          %s122 = sand.u32 %s25, 1
          %s123 = smul.addr %s122, 40
          %s124 = scalar_lea.vmem [#allocation2], %s123
          %s125 = smul.u32 5, %s15
          %s126 = ssub.s32 9, %s125
          %p127 = scmp.lt.s32.totalorder %s126, 5
          %s128 = scalar_select %p127, %s126, 5
          %s129 = smul.u32 8, %s128
          %s130 = ssub.s32 40, %s129
          %s131 = sshll.u32 %s130, 4
          %132 = vsyncadd %s121, %s131
          %p133 = scmp.ne.s32.totalorder 0, %s129
          %s134 = smul.addr %s125, 8
          %s135 = scalar_lea.hbm %s0, %s134
          %s136 = smul.u32 8, %s128
          %s137 = sshll.u32 %s135, 4
          %s138 = int_to_ptr.hbm [resolvable:$true] %s137
          %s139 = sshll.u32 %s124, 4
          %s140 = int_to_ptr.vmem [resolvable:$true] %s139
          %s141 = sshll.u32 %s136, 4
          %145 = dma.hbm_to_vmem [thread:$0]  (%p133), %s138, %s141, %s140, %s121, 128, 128, 8
        $region24: #{tpu_custom_call.1} parent=19 // pred_fallthru
          _
      $region20: #{tpu_custom_call.1} parent=5 // pred_fallthru
        _
      %p146 = scmp.le.s32.totalorder 1, %s15
      %p147 = scmp.lt.s32.totalorder %s15, 3
      %p148 = pnand %p146, %p147
      %p149 = pneg %p148
      // Predicated region
      $region25: #{tpu_custom_call.1} parent=5 // pred_check
        _
      $region26: #{tpu_custom_call.1} parent=5 // pred_check_branch
        %151 = sbr.rel (%p148) target = $region28
      $region27: #{tpu_custom_call.1} parent=5 // pred_region
        %s152 = ssub.s32 %s15, 1
        %s153 = sand.u32 %s28, 1
        %s154 = scalar_lea.sflag [#allocation3], %s153
        %s155 = sand.u32 %s28, 1
        %s156 = smul.addr %s155, 40
        %s157 = scalar_lea.vmem [#allocation2], %s156
        // Predicated region
        $region29: #{tpu_custom_call.1} parent=27 // pred_check
          %p158 = pneg %p41
        $region30: #{tpu_custom_call.1} parent=27 // pred_check_branch
          %160 = sbr.rel (%p158) target = $region32
        $region31: #{tpu_custom_call.1} parent=27 // pred_region
          %162 = dma.done %s154, 640
        $region32: #{tpu_custom_call.1} parent=27 // pred_fallthru
          _
        // Predicated region
        $region33: #{tpu_custom_call.1} parent=27 // pred_check
          %p163 = pneg %p62
        $region34: #{tpu_custom_call.1} parent=27 // pred_check_branch
          %165 = sbr.rel (%p163) target = $region36
        $region35: #{tpu_custom_call.1} parent=27 // pred_region
          %167 = dma.done [#allocation5], 16
        $region36: #{tpu_custom_call.1} parent=27 // pred_fallthru
          _
        %168 = sfence
        %s169 = sand.u32 %s28, 1
        %s170 = scalar_lea.sflag [#allocation3], %s169
        %s171 = sand.u32 %s28, 1
        %s172 = smul.addr %s171, 40
        %s173 = scalar_lea.vmem [#allocation2], %s172
        %p174 = pneg %p41
        %p175 = pneg %p38
        %p176 = pneg %p62
        %p177 = pneg %p59
        %p178 = pneg %p88
        %p179 = pneg %p85
        %s180 = sand.u32 %s75, 1
        %s181 = scalar_lea.sflag [#allocation4], %s180
        %s182 = sand.u32 %s75, 1
        %s183 = smul.addr %s182, 40
        %s184 = scalar_lea.vmem [#allocation7], %s183
        %s185 = smul.u32 5, %s20
        %s186 = ssub.s32 9, %s185
        %p187 = scmp.lt.s32.totalorder %s186, 5
        %s188 = scalar_select %p187, %s186, 5
        %s189 = smul.u32 8, %s188
        %s190 = smul.u32 5, %s20
        %s191 = ssub.s32 9, %s190
        %p192 = scmp.lt.s32.totalorder %s191, 5
        %s193 = scalar_select %p192, %s191, 5
        %s194 = smul.u32 8, %s193
        %s195 = sld [smem:[#allocation6]]
        %s196 = sld [smem:[#allocation6 + $0x1]]
        %v197 = vld [vmem:[%s157] sm:$0xff]
        %v198 = vld [vmem:[%s157 + $0x8] sm:$0xff]
        %v199 = vld [vmem:[%s157 + $0x10] sm:$0xff]
        %v200 = vld [vmem:[%s157 + $0x18] sm:$0xff]
        %v201 = vld [vmem:[%s157 + $0x20] sm:$0xff]
        %v202 = vstv %s195
        %v203 = vmul.f32 %v197, %v202
        %v204 = vmul.f32 %v198, %v202
        %v205 = vmul.f32 %v199, %v202
        %v206 = vmul.f32 %v200, %v202
        %v207 = vmul.f32 %v201, %v202
        %v208 = vstv %s196
        %v209 = vadd.f32 %v203, %v208
        %v210 = vadd.f32 %v204, %v208
        %v211 = vadd.f32 %v205, %v208
        %v212 = vadd.f32 %v206, %v208
        %v213 = vadd.f32 %v207, %v208
        %v214 = vmul.f32 %v209, 0.5
        %v215 = vmul.f32 %v210, 0.5
        %v216 = vmul.f32 %v211, 0.5
        %v217 = vmul.f32 %v212, 0.5
        %v218 = vmul.f32 %v213, 0.5
        %v219 = vtanh.pop %v214
        %v220 = vtanh.pop %v215
        %v221 = vtanh.pop %v216
        %v222 = vtanh.pop %v217
        %v223 = vtanh.pop %v218
        %v224 = vmul.f32 %v219, 0.5
        %v225 = vmul.f32 %v220, 0.5
        %v226 = vmul.f32 %v221, 0.5
        %v227 = vmul.f32 %v222, 0.5
        %v228 = vmul.f32 %v223, 0.5
        %v229 = vadd.f32 %v224, 0.5
        %v230 = vadd.f32 %v225, 0.5
        %v231 = vadd.f32 %v226, 0.5
        %v232 = vadd.f32 %v227, 0.5
        %v233 = vadd.f32 %v228, 0.5
        %v234 = vmul.f32 %v229, %v202
        %v235 = vmul.f32 %v230, %v202
        %v236 = vmul.f32 %v231, %v202
        %v237 = vmul.f32 %v232, %v202
        %v238 = vmul.f32 %v233, %v202
        %v239 = vadd.f32 %v234, %v208
        %v240 = vadd.f32 %v235, %v208
        %v241 = vadd.f32 %v236, %v208
        %v242 = vadd.f32 %v237, %v208
        %v243 = vadd.f32 %v238, %v208
        %244 = vst [vmem:[%s184] sm:$0xff] %v239
        %245 = vst [vmem:[%s184 + $0x8] sm:$0xff] %v240
        %246 = vst [vmem:[%s184 + $0x10] sm:$0xff] %v241
        %247 = vst [vmem:[%s184 + $0x18] sm:$0xff] %v242
        %248 = vst [vmem:[%s184 + $0x20] sm:$0xff] %v243
        %s249 = sand.u32 %s75, 1
        %s250 = scalar_lea.sflag [#allocation4], %s249
        %s251 = sand.u32 %s75, 1
        %s252 = smul.addr %s251, 40
        %s253 = scalar_lea.vmem [#allocation7], %s252
        // Predicated region
        $region37: #{tpu_custom_call.1} parent=27 // pred_check
          %p254 = pneg %p85
        $region38: #{tpu_custom_call.1} parent=27 // pred_check_branch
          %256 = sbr.rel (%p254) target = $region40
        $region39: #{tpu_custom_call.1} parent=27 // pred_region
          %s257 = smul.u32 5, %s20
          %s258 = ssub.s32 9, %s257
          %p259 = scmp.lt.s32.totalorder %s258, 5
          %s260 = scalar_select %p259, %s258, 5
          %s261 = smul.u32 8, %s260
          %s262 = ssub.s32 40, %s261
          %s263 = sshll.u32 %s262, 4
          %264 = vsyncadd %s250, %s263
          %p265 = scmp.ne.s32.totalorder 0, %s261
          %s266 = smul.addr %s257, 8
          %s267 = scalar_lea.hbm %s2, %s266
          %s268 = smul.u32 8, %s260
          %s269 = sshll.u32 %s253, 4
          %s270 = int_to_ptr.vmem [resolvable:$true] %s269
          %s271 = sshll.u32 %s267, 4
          %s272 = int_to_ptr.hbm [resolvable:$true] %s271
          %s273 = sshll.u32 %s268, 4
          %277 = dma.vmem_to_hbm [thread:$0]  (%p265), %s270, %s273, %s272, %s250, 128, 128, 8
        $region40: #{tpu_custom_call.1} parent=27 // pred_fallthru
          _
      $region28: #{tpu_custom_call.1} parent=5 // pred_fallthru
        _
      %p278 = scmp.le.s32.totalorder 2, %s15
      // Predicated region
      $region41: #{tpu_custom_call.1} parent=5 // pred_check
        %p279 = pneg %p278
      $region42: #{tpu_custom_call.1} parent=5 // pred_check_branch
        %281 = sbr.rel (%p279) target = $region44
      $region43: #{tpu_custom_call.1} parent=5 // pred_region
        %s282 = ssub.s32 %s15, 2
        // Predicated region
        $region45: #{tpu_custom_call.1} parent=43 // pred_check
          %p283 = pneg %p91
        $region46: #{tpu_custom_call.1} parent=43 // pred_check_branch
          %285 = sbr.rel (%p283) target = $region48
        $region47: #{tpu_custom_call.1} parent=43 // pred_region
          %s286 = sand.u32 %s76, 1
          %s287 = scalar_lea.sflag [#allocation4], %s286
          %s288 = sand.u32 %s76, 1
          %s289 = smul.addr %s288, 40
          %s290 = scalar_lea.vmem [#allocation7], %s289
          %292 = dma.done %s287, 640
        $region48: #{tpu_custom_call.1} parent=43 // pred_fallthru
          _
      $region44: #{tpu_custom_call.1} parent=5 // pred_fallthru
        _
    $region6: #{tpu_custom_call.1} parent=1 // loop_footer
      %s19 = sadd.s32 1, %s15
    $region7: #{tpu_custom_call.1} parent=1 // loop_footer_branch
      %14 = sbr.rel target = $region3
    $region8: #{tpu_custom_call.1} parent=1 // loop_exit
      _
    %293 = vsyncpa [#allocation3], 1
    %s294 = scalar_lea.sflag [#allocation3], 1
    %295 = vsyncpa %s294, 1
    %296 = vsyncpa [#allocation4], 1
    %s297 = scalar_lea.sflag [#allocation4], 1
    %298 = vsyncpa %s297, 1
    %299 = vsyncpa [#allocation5], 1
    %s300 = scalar_lea.sflag [#allocation5], 1
    %301 = vsyncpa %s300, 1

</llo_original>
